<compile_context>
chip_gen: v7x
topology: tpu7x:2x2x1
jax: 0.10.0
libtpu: 0.0.40
codegen_flags: <defaults>
</compile_context>

<pallas_src>
import jax
import jax.numpy as jnp
from jax.experimental import pallas as pl
from jax.experimental.pallas import tpu as pltpu


def _round_up(x, m):
    return ((x + m - 1) // m) * m


def _sublane_align(dtype):
    # Native sublane packing: f32 -> 8, bf16 -> 16, int8/fp8 -> 32.
    return 8 * max(1, 4 // jnp.dtype(dtype).itemsize)


def _pick_tile(dim, target, single_align, multi_align):
    """Return (tile, padded_dim) with tile | padded_dim and layout-legal alignment."""
    if dim <= target:
        t = _round_up(dim, single_align)      # one full-dim tile
        return t, t
    t = _round_up(target, multi_align)
    return t, _round_up(dim, t)


# --------------------------------------------------------------------------- #
# Kernels
# --------------------------------------------------------------------------- #
def _linear_kernel_single(x_ref, w_ref, b_ref, o_ref):
    # Weight-resident / single-K-tile path: one MXU pass per (batch, T, N) tile.
    # x_ref: (tt, tk) bf16, w_ref: (tk, tn) bf16, b_ref: (1, tn) f32.
    acc = jnp.dot(x_ref[...], w_ref[...], preferred_element_type=jnp.float32)
    o_ref[...] = (acc + b_ref[...].astype(jnp.float32)).astype(o_ref.dtype)


def _linear_kernel_acc_f32out(x_ref, w_ref, b_ref, o_ref):
    # Multi-K-tile path, f32 output: the out index_map ignores k, so the output
    # block stays resident in VMEM across the K loop -> accumulate into it
    # directly (no scratch, no finalize copy).
    k = pl.program_id(3)

    @pl.when(k == 0)
    def _init():
        o_ref[...] = jnp.broadcast_to(b_ref[...].astype(o_ref.dtype), o_ref.shape)

    o_ref[...] += jnp.dot(x_ref[...], w_ref[...], preferred_element_type=jnp.float32)


def _linear_kernel_acc_scratch(x_ref, w_ref, b_ref, o_ref, acc_ref):
    # Multi-K-tile path with a narrow output dtype: accumulate in f32 scratch.
    k = pl.program_id(3)

    @pl.when(k == 0)
    def _init():
        acc_ref[...] = jnp.zeros_like(acc_ref)

    acc_ref[...] += jnp.dot(x_ref[...], w_ref[...], preferred_element_type=jnp.float32)

    @pl.when(k == pl.num_programs(3) - 1)
    def _finalize():
        o_ref[...] = (acc_ref[...] + b_ref[...].astype(jnp.float32)).astype(o_ref.dtype)


# --------------------------------------------------------------------------- #
# Wrapper
# --------------------------------------------------------------------------- #
def linear_pallas(x, w, b, *, tm=512, tn=1024, tk=512,
                  compute_dtype=jnp.bfloat16,
                  weight_resident_vmem_bytes=24 * 1024 * 1024):
    """y[b, t, n] = sum_k x[b, k, t] * w[k, n] + bias[n].

    x: (B, K, T) channel-major activations (as the PyTorch module receives them)
    w: (K, N)    weight (== nn.Linear.weight.T)
    b: (N,)      bias
    returns (B, T, N) in x.dtype (accumulation is always f32 in-kernel).
    """
    B, K, T = x.shape
    Kw, N = w.shape
    assert K == Kw, "weight inputdim mismatch"
    assert b.shape == (N,)

    out_dtype = x.dtype
    cdt = jnp.dtype(compute_dtype) if compute_dtype is not None else jnp.dtype(x.dtype)
    c_item = cdt.itemsize
    o_item = jnp.dtype(out_dtype).itemsize

    # T is the sublane axis of the x slab and of the output tile; K is the lane
    # axis of x (128-aligned when split) and the sublane axis of w; N is the
    # lane axis of w / out (always 128 -> lane-dense, unmasked vst).
    sub_t = max(_sublane_align(cdt), _sublane_align(out_dtype))
    tnn, N_pad = _pick_tile(N, tn, 128, 128)
    tkk, K_pad = _pick_tile(K, tk, _sublane_align(cdt), 128)
    tt, T_pad = _pick_tile(T, tm, sub_t, sub_t)

    single_k = (tkk == K_pad)

    # Weight-resident fast path: if the whole (K_pad, N_pad) weight slab plus the
    # matching x / out tiles fit comfortably in VMEM, stop tiling N so the weight
    # is fetched once per batch/T tile and never re-streamed across N.
    if single_k and tnn < N_pad:
        merged = (2 * tt * K_pad * c_item        # x (double buffered)
                  + 2 * K_pad * N_pad * c_item   # w
                  + 2 * tt * N_pad * o_item      # out
                  + 2 * N_pad * 4)               # bias
        if merged <= weight_resident_vmem_bytes:
            tnn = N_pad

    # v7x megacore: make sure there are >= 2 parallel grid tiles so both
    # TensorCores get work (no-op on v5e/v6e, harmless otherwise).
    if B * (T_pad // tt) * (N_pad // tnn) < 2:
        half = _round_up(tt // 2, sub_t)
        if 0 < half < tt and T_pad % half == 0:
            tt = half

    # ---- Operand preparation (one fused XLA pass per tensor) ----------------
    # permute(0,2,1) + zero padding + bf16 cast of x fuse into a single HBM
    # read/write pass; the kernel then needs no in-kernel transpose at all.
    xt = jnp.swapaxes(x, 1, 2)                       # (B, T, K)
    if (T_pad, K_pad) != (T, K):
        xt = jnp.pad(xt, ((0, 0), (0, T_pad - T), (0, K_pad - K)))
    xt = xt.astype(cdt)

    if (K_pad, N_pad) != (K, N):
        w = jnp.pad(w, ((0, K_pad - K), (0, N_pad - N)))
    w = w.astype(cdt)
    b2 = jnp.pad(b.astype(jnp.float32), (0, N_pad - N)).reshape(1, N_pad)

    n_t, n_n, n_k = T_pad // tt, N_pad // tnn, K_pad // tkk
    use_scratch = (not single_k) and (jnp.dtype(out_dtype) != jnp.float32)

    if single_k:
        kernel = _linear_kernel_single
        grid = (B, n_t, n_n)
        in_specs = [
            pl.BlockSpec((None, tt, tkk), lambda bb, ti, ni: (bb, ti, 0)),
            pl.BlockSpec((tkk, tnn), lambda bb, ti, ni: (0, ni)),
            pl.BlockSpec((1, tnn), lambda bb, ti, ni: (0, ni)),
        ]
        out_specs = pl.BlockSpec((None, tt, tnn), lambda bb, ti, ni: (bb, ti, ni))
        scratch_shapes = []
        dim_sem = ("parallel", "parallel", "parallel")
    else:
        kernel = _linear_kernel_acc_scratch if use_scratch else _linear_kernel_acc_f32out
        grid = (B, n_t, n_n, n_k)
        in_specs = [
            pl.BlockSpec((None, tt, tkk), lambda bb, ti, ni, ki: (bb, ti, ki)),
            pl.BlockSpec((tkk, tnn), lambda bb, ti, ni, ki: (ki, ni)),
            pl.BlockSpec((1, tnn), lambda bb, ti, ni, ki: (0, ni)),
        ]
        out_specs = pl.BlockSpec((None, tt, tnn), lambda bb, ti, ni, ki: (bb, ti, ni))
        scratch_shapes = [pltpu.VMEM((tt, tnn), jnp.float32)] if use_scratch else []
        dim_sem = ("parallel", "parallel", "parallel", "arbitrary")

    # VMEM limit proportional to the actual double-buffered footprint; keeps
    # headroom on v7x's 64 MiB/TC part and allows larger tiles than the 32 MiB
    # default scoped limit when needed.
    footprint = (2 * (tt * tkk * c_item + tkk * tnn * c_item
                      + tt * tnn * o_item + tnn * 4)
                 + (tt * tnn * 4 if use_scratch else 0))
    vmem_limit = int(min(64 * 1024 * 1024,
                         max(8 * 1024 * 1024, footprint + footprint // 2 + (2 << 20))))

    # Advisory cost: reflect actual streamed traffic (x re-read once per N tile,
    # w re-read once per (batch, T tile)), not one pass each.
    cost = pl.CostEstimate(
        flops=2 * B * T_pad * K_pad * N_pad,
        transcendentals=0,
        bytes_accessed=(B * T_pad * K_pad * c_item * n_n
                        + K_pad * N_pad * c_item * B * n_t
                        + N_pad * 4 * B * n_t
                        + B * T_pad * N_pad * o_item),
    )

    out = pl.pallas_call(
        kernel,
        out_shape=jax.ShapeDtypeStruct((B, T_pad, N_pad), out_dtype),
        grid=grid,
        in_specs=in_specs,
        out_specs=out_specs,
        scratch_shapes=scratch_shapes,
        compiler_params=pltpu.CompilerParams(
            dimension_semantics=dim_sem,
            vmem_limit_bytes=vmem_limit,
        ),
        cost_estimate=cost,
    )(xt, w, b2)

    # TODO(synk): a fully pad-free ragged path (masked store on the last T/N
    # tile) would remove this output slice pass for non-aligned T/N.
    if (T_pad, N_pad) != (T, N):
        out = out[:, :T, :N]
    return out


def linear_module_forward(x, w, b):
    """Reproduces Linear.forward: (B, inputdim, T) -> (B, T, modeldim).

    w is stored as (inputdim, modeldim), i.e. nn.Linear.weight.T.
    x / w are cast to bfloat16 for peak MXU rate; accumulation and the bias add
    stay f32 in-kernel (pass compute_dtype=None for full f32 compute).
    """
    return linear_pallas(x, w, b)


if __name__ == "__main__":
    batch, inputdim, seq, modeldim = 2, 16, 8, 32

    key = jax.random.PRNGKey(0)
    kx, kw, kb = jax.random.split(key, 3)

    # Deterministic init mimicking nn.Linear default (U[-1/sqrt(K), 1/sqrt(K)])
    bound = 1.0 / (inputdim ** 0.5)
    w = jax.random.uniform(kw, (inputdim, modeldim), jnp.float32, -bound, bound)
    b = jax.random.uniform(kb, (modeldim,), jnp.float32, -bound, bound)

    # Input consistent with the module: (batch, features, windows * reduction)
    x = jax.random.normal(kx, (batch, inputdim, seq), jnp.float32)

    fwd = jax.jit(linear_module_forward)
    y = jax.block_until_ready(fwd(x, w, b))

    # Reference with the same bf16 operand rounding + f32 accumulation.
    x_c = x.astype(jnp.bfloat16).astype(jnp.float32)
    w_c = w.astype(jnp.bfloat16).astype(jnp.float32)
    ref = jnp.einsum("bkt,kn->btn", x_c, w_c) + b

    assert y.shape == (batch, seq, modeldim)
    assert y.dtype == x.dtype
    err = float(jnp.max(jnp.abs(y - ref)))
    assert jnp.allclose(y, ref, atol=1e-4, rtol=1e-4), err

    print("KERNEL_OK")
</pallas_src>

<mosaic_0001>
module attributes {stable_mosaic.version = 11 : i64} {
  func.func @_linear_kernel_single(%arg0: i32, %arg1: i32, %arg2: i32, %arg3: memref<1x16x16xbf16, #tpu.memory_space<vmem>>, %arg4: memref<16x128xbf16, #tpu.memory_space<vmem>>, %arg5: memref<1x128xf32, #tpu.memory_space<vmem>>, %arg6: memref<1x16x128xf32, #tpu.memory_space<vmem>>) attributes {dimension_semantics = [#tpu.dimension_semantics<parallel>, #tpu.dimension_semantics<parallel>, #tpu.dimension_semantics<parallel>], iteration_bounds = array<i64: 2, 1, 1>, scalar_prefetch = 0 : i64, scratch_operands = 0 : i64, tpu.core_type = #tpu.core_type<tc>, window_params = [{transform_indices = @transform_0, window_bounds = array<i64: 1, 16, 16>}, {transform_indices = @transform_1, window_bounds = array<i64: 16, 128>}, {transform_indices = @transform_2, window_bounds = array<i64: 1, 128>}, {transform_indices = @transform_3, window_bounds = array<i64: 1, 16, 128>}]} {
    %c0 = arith.constant 0 : index
    %c0_0 = arith.constant 0 : index
    %c0_1 = arith.constant 0 : index
    %0 = vector.load %arg3[%c0, %c0_0, %c0_1] : memref<1x16x16xbf16, #tpu.memory_space<vmem>>, vector<1x16x16xbf16>
    %1 = vector.shape_cast %0 : vector<1x16x16xbf16> to vector<16x16xbf16>
    %c0_2 = arith.constant 0 : index
    %c0_3 = arith.constant 0 : index
    %2 = vector.load %arg4[%c0_2, %c0_3] : memref<16x128xbf16, #tpu.memory_space<vmem>>, vector<16x128xbf16>
    %cst = arith.constant dense<0.000000e+00> : vector<16x128xf32>
    %3 = tpu.matmul %1, %2, %cst {dimension_numbers = #tpu.dot_dimension_numbers<[1], [0], [0], [1], [0, 0, 1, 1], [], []>} : vector<16x16xbf16>, vector<16x128xbf16>, vector<16x128xf32> -> vector<16x128xf32>
    %c0_4 = arith.constant 0 : index
    %c0_5 = arith.constant 0 : index
    %4 = vector.load %arg5[%c0_4, %c0_5] : memref<1x128xf32, #tpu.memory_space<vmem>>, vector<1x128xf32>
    %5 = vector.broadcast %4 : vector<1x128xf32> to vector<16x128xf32>
    %6 = arith.addf %3, %5 : vector<16x128xf32>
    %c0_6 = arith.constant 0 : index
    %c0_7 = arith.constant 0 : index
    %c0_8 = arith.constant 0 : index
    %7 = vector.load %arg6[%c0_6, %c0_7, %c0_8] : memref<1x16x128xf32, #tpu.memory_space<vmem>>, vector<1x16x128xf32>
    %8 = vector.shape_cast %7 : vector<1x16x128xf32> to vector<16x128xf32>
    %9 = vector.shape_cast %6 : vector<16x128xf32> to vector<1x16x128xf32>
    tpu.vector_store %arg6[%c0_6, %c0_7, %c0_8], %9 {strides = array<i32>} : memref<1x16x128xf32, #tpu.memory_space<vmem>>, vector<1x16x128xf32>,
    return
  }
  func.func @transform_0(%arg0: i32, %arg1: i32, %arg2: i32) -> (i32, i32, i32) {
    %c0_i32 = arith.constant 0 : i32
    %c0_i32_0 = arith.constant 0 : i32
    return %arg0, %arg1, %c0_i32 : i32, i32, i32
  }
  func.func @transform_1(%arg0: i32, %arg1: i32, %arg2: i32) -> (i32, i32) {
    %c0_i32 = arith.constant 0 : i32
    %c0_i32_0 = arith.constant 0 : i32
    return %c0_i32, %arg2 : i32, i32
  }
  func.func @transform_2(%arg0: i32, %arg1: i32, %arg2: i32) -> (i32, i32) {
    %c0_i32 = arith.constant 0 : i32
    %c0_i32_0 = arith.constant 0 : i32
    return %c0_i32, %arg2 : i32, i32
  }
  func.func @transform_3(%arg0: i32, %arg1: i32, %arg2: i32) -> (i32, i32, i32) {
    %c0_i32 = arith.constant 0 : i32
    return %arg0, %arg1, %arg2 : i32, i32, i32
  }
}

</mosaic_0001>

<llo_original>
// kernel: linear_module_forward.1
$region0: #{linear_module_forward.1}
  #allocation0 [shape = 'u32[]', space=smem, size = 0x4, offset = 0x4, fixed_abs, tag = 'smem constant byte address 0x4 - core index']
  #allocation1 [shape = 'u32[144,128]{1,0:T(1,128)}', space=vmem, size = 0x12000, scoped, tag = 'internal scratch']
  %s0 = inlined_call_operand.vmem [shape: bf16[2,16,16], index: 0, kind: input, shape index: {}]
  %s1 = inlined_call_operand.vmem [shape: bf16[16,128], index: 1, kind: input, shape index: {}]
  %s2 = inlined_call_operand.vmem [shape: f32[1,128], index: 2, kind: input, shape index: {}]
  %s3 = inlined_call_operand.vmem [shape: f32[2,16,128], index: 3, kind: output, shape index: {}]
  %s4 = sld [smem:[#allocation0]]
  $region45: #{linear_module_forward.1} parent=0
    _
  %s6 = ssub.s32 1, %s4
  %s7 = scalar_select 0, %s6, %s4
  loop: start=0, step=1, limit=4
  $region2: #{linear_module_forward.1} parent=0 // loop_pre_header
    _
  $region3: #{linear_module_forward.1} parent=0 // loop_header
    %s9 = sphi 0, %s13
    %p10 = scmp.ge.s32.totalorder %s9, 4
    %s16 = sphi 0, %s35
    %s17 = sphi 0, %s31
    %s18 = sphi 0, %s27
    %s19 = sphi 0, %s16
    %s20 = sphi 0, %s17
    %s21 = sphi 0, %s18
    %s22 = sphi 0, %s19
    %s23 = sphi 0, %s20
    %s24 = sphi 0, %s21
    %s40 = sphi 0, %s42
    %s43 = sphi 0, %s40
    %s44 = sphi 0, %s43
    %s60 = sphi 0, %s44
    %s66 = sphi 0, %s68
    %s69 = sphi 0, %s66
    %s70 = sphi 0, %s69
    %s86 = sphi 0, %s70
    %s92 = sphi 0, %s94
    %s95 = sphi 0, %s92
    %s96 = sphi 0, %s95
    %s112 = sphi 0, %s96
    %s122 = sphi 0, %s124
    %s125 = sphi 0, %s122
    %s126 = sphi 0, %s125
    %s142 = sphi 0, %s126
  $region4: #{linear_module_forward.1} parent=0 // loop_header_branch
    %12 = sbr.rel (%p10) target = $region8
  $region5: #{linear_module_forward.1} parent=0 // loop_body
    %s14 = ssub.s32 %s9, 1
    %s15 = ssub.s32 %s9, 2
    %s25 = sadd.s32 1, %s18
    %p26 = scmp.ge.s32.totalorder %s25, 1
    %s27 = scalar_select %p26, 0, %s25
    %s28 = sadd.s32 1, %s17
    %s29 = scalar_select %p26, %s28, %s17
    %p30 = scmp.ge.s32.totalorder %s29, 1
    %s31 = scalar_select %p30, 0, %s29
    %s32 = sadd.s32 1, %s16
    %s33 = scalar_select %p30, %s32, %s16
    %p34 = scmp.ge.s32.totalorder %s33, 2
    %s35 = scalar_select %p34, 0, %s33
    %s36 = ssub.s32 %s16, %s35
    %s37 = ssub.s32 %s17, %s31
    %s38 = sor.u32 %s36, %s37
    %p39 = scmp.eq.s32.totalorder %s38, 0
    %s41 = sadd.s32 %s40, 1
    %s42 = scalar_select %p39, %s40, %s41
    %p45 = pneg %p39
    %p46 = scmp.eq.s32.totalorder %s9, 1
    %p47 = por %p45, %p46
    %p48 = scmp.ne.s32.totalorder %s40, %s43
    %p49 = scmp.eq.s32.totalorder %s9, 0
    %p50 = por %p48, %p49
    %p51 = scmp.ne.s32.totalorder %s40, %s43
    %p52 = scmp.eq.s32.totalorder %s14, 1
    %p53 = por %p51, %p52
    %p54 = scmp.ne.s32.totalorder %s43, %s44
    %p55 = scmp.eq.s32.totalorder %s14, 0
    %p56 = por %p54, %p55
    %p57 = scmp.ne.s32.totalorder %s43, %s44
    %p58 = scmp.eq.s32.totalorder %s15, 1
    %p59 = por %p57, %p58
    %p61 = scmp.ne.s32.totalorder %s44, %s60
    %p62 = scmp.eq.s32.totalorder %s15, 0
    %p63 = por %p61, %p62
    %s64 = ssub.s32 %s18, %s27
    %p65 = scmp.eq.s32.totalorder %s64, 0
    %s67 = sadd.s32 %s66, 1
    %s68 = scalar_select %p65, %s66, %s67
    %p71 = pneg %p65
    %p72 = scmp.eq.s32.totalorder %s9, 1
    %p73 = por %p71, %p72
    %p74 = scmp.ne.s32.totalorder %s66, %s69
    %p75 = scmp.eq.s32.totalorder %s9, 0
    %p76 = por %p74, %p75
    %p77 = scmp.ne.s32.totalorder %s66, %s69
    %p78 = scmp.eq.s32.totalorder %s14, 1
    %p79 = por %p77, %p78
    %p80 = scmp.ne.s32.totalorder %s69, %s70
    %p81 = scmp.eq.s32.totalorder %s14, 0
    %p82 = por %p80, %p81
    %p83 = scmp.ne.s32.totalorder %s69, %s70
    %p84 = scmp.eq.s32.totalorder %s15, 1
    %p85 = por %p83, %p84
    %p87 = scmp.ne.s32.totalorder %s70, %s86
    %p88 = scmp.eq.s32.totalorder %s15, 0
    %p89 = por %p87, %p88
    %s90 = ssub.s32 %s18, %s27
    %p91 = scmp.eq.s32.totalorder %s90, 0
    %s93 = sadd.s32 %s92, 1
    %s94 = scalar_select %p91, %s92, %s93
    %p97 = pneg %p91
    %p98 = scmp.eq.s32.totalorder %s9, 1
    %p99 = por %p97, %p98
    %p100 = scmp.ne.s32.totalorder %s92, %s95
    %p101 = scmp.eq.s32.totalorder %s9, 0
    %p102 = por %p100, %p101
    %p103 = scmp.ne.s32.totalorder %s92, %s95
    %p104 = scmp.eq.s32.totalorder %s14, 1
    %p105 = por %p103, %p104
    %p106 = scmp.ne.s32.totalorder %s95, %s96
    %p107 = scmp.eq.s32.totalorder %s14, 0
    %p108 = por %p106, %p107
    %p109 = scmp.ne.s32.totalorder %s95, %s96
    %p110 = scmp.eq.s32.totalorder %s15, 1
    %p111 = por %p109, %p110
    %p113 = scmp.ne.s32.totalorder %s96, %s112
    %p114 = scmp.eq.s32.totalorder %s15, 0
    %p115 = por %p113, %p114
    %s116 = ssub.s32 %s16, %s35
    %s117 = ssub.s32 %s17, %s31
    %s118 = sor.u32 %s116, %s117
    %s119 = ssub.s32 %s18, %s27
    %s120 = sor.u32 %s118, %s119
    %p121 = scmp.eq.s32.totalorder %s120, 0
    %s123 = sadd.s32 %s122, 1
    %s124 = scalar_select %p121, %s122, %s123
    %p127 = pneg %p121
    %p128 = scmp.eq.s32.totalorder %s9, 1
    %p129 = por %p127, %p128
    %p130 = scmp.ne.s32.totalorder %s122, %s125
    %p131 = scmp.eq.s32.totalorder %s9, 0
    %p132 = por %p130, %p131
    %p133 = scmp.ne.s32.totalorder %s122, %s125
    %p134 = scmp.eq.s32.totalorder %s14, 1
    %p135 = por %p133, %p134
    %p136 = scmp.ne.s32.totalorder %s125, %s126
    %p137 = scmp.eq.s32.totalorder %s14, 0
    %p138 = por %p136, %p137
    %p139 = scmp.ne.s32.totalorder %s125, %s126
    %p140 = scmp.eq.s32.totalorder %s15, 1
    %p141 = por %p139, %p140
    %p143 = scmp.ne.s32.totalorder %s126, %s142
    %p144 = scmp.eq.s32.totalorder %s15, 0
    %p145 = por %p143, %p144
    %p146 = scmp.le.s32.totalorder 1, %s9
    %p147 = scmp.lt.s32.totalorder %s9, 3
    %p148 = pnand %p146, %p147
    %p149 = pneg %p148
    // Predicated region
    $region9: #{linear_module_forward.1} parent=5 // pred_check
      _
    $region10: #{linear_module_forward.1} parent=5 // pred_check_branch
      %151 = sbr.rel (%p148) target = $region12
    $region11: #{linear_module_forward.1} parent=5 // pred_region
      %s152 = ssub.s32 %s9, 1
      // Predicated region
      $region13: #{linear_module_forward.1} parent=11 // pred_check
        %p153 = pneg %p82
      $region14: #{linear_module_forward.1} parent=11 // pred_check_branch
        %155 = sbr.rel (%p153) target = $region16
      $region15: #{linear_module_forward.1} parent=11 // pred_region
        %p156 = scmp.lt.s32.totalorder %s21, 0
        %s157 = scalar_select %p156, %s21, 0
        %s158 = smul.addr %s157, 4
        %s159 = scalar_lea.vmem %s1, %s158
      $region16: #{linear_module_forward.1} parent=11 // pred_fallthru
        _
      // Predicated region
      $region17: #{linear_module_forward.1} parent=11 // pred_check
        %p160 = pneg %p108
      $region18: #{linear_module_forward.1} parent=11 // pred_check_branch
        %162 = sbr.rel (%p160) target = $region20
      $region19: #{linear_module_forward.1} parent=11 // pred_region
        %p163 = scmp.lt.s32.totalorder %s21, 0
        %s164 = scalar_select %p163, %s21, 0
        %s165 = scalar_lea.vmem %s2, %s164
      $region20: #{linear_module_forward.1} parent=11 // pred_fallthru
        _
    $region12: #{linear_module_forward.1} parent=5 // pred_fallthru
      _
    %p166 = scmp.lt.s32.totalorder %s9, 2
    // Predicated region
    $region21: #{linear_module_forward.1} parent=5 // pred_check
      %p167 = pneg %p166
    $region22: #{linear_module_forward.1} parent=5 // pred_check_branch
      %169 = sbr.rel (%p167) target = $region24
    $region23: #{linear_module_forward.1} parent=5 // pred_region
      // Predicated region
      $region25: #{linear_module_forward.1} parent=23 // pred_check
        %p170 = pneg %p50
      $region26: #{linear_module_forward.1} parent=23 // pred_check_branch
        %172 = sbr.rel (%p170) target = $region28
      $region27: #{linear_module_forward.1} parent=23 // pred_region
        %s173 = smul.u32 2, %s17
        %p174 = scmp.lt.s32.totalorder %s16, 1
        %s175 = scalar_select %p174, %s16, 1
        %p176 = scmp.lt.s32.totalorder %s173, 1
        %s177 = scalar_select %p176, %s173, 1
        %s178 = smul.addr %s175, 2
        %s179 = sadd.s32 %s177, %s178
        %s180 = smul.addr %s179, 4
        %s181 = scalar_lea.vmem %s0, %s180
        %s182 = smul.u32 2, %s17
      $region28: #{linear_module_forward.1} parent=23 // pred_fallthru
        _
    $region24: #{linear_module_forward.1} parent=5 // pred_fallthru
      _
    %p183 = scmp.le.s32.totalorder 1, %s9
    %p184 = scmp.lt.s32.totalorder %s9, 3
    %p185 = pnand %p183, %p184
    %p186 = pneg %p185
    // Predicated region
    $region29: #{linear_module_forward.1} parent=5 // pred_check
      _
    $region30: #{linear_module_forward.1} parent=5 // pred_check_branch
      %188 = sbr.rel (%p185) target = $region32
    $region31: #{linear_module_forward.1} parent=5 // pred_region
      %s189 = ssub.s32 %s9, 1
      %s190 = smul.u32 2, %s20
      %p191 = scmp.lt.s32.totalorder %s19, 1
      %s192 = scalar_select %p191, %s19, 1
      %p193 = scmp.lt.s32.totalorder %s190, 1
      %s194 = scalar_select %p193, %s190, 1
      %s195 = smul.addr %s192, 2
      %s196 = sadd.s32 %s194, %s195
      %s197 = smul.addr %s196, 4
      %s198 = scalar_lea.vmem %s0, %s197
      %p199 = pneg %p56
      %p200 = pneg %p53
      %p201 = scmp.lt.s32.totalorder %s21, 0
      %s202 = scalar_select %p201, %s21, 0
      %s203 = smul.addr %s202, 4
      %s204 = scalar_lea.vmem %s1, %s203
      %p205 = pneg %p82
      %p206 = pneg %p79
      %p207 = scmp.lt.s32.totalorder %s21, 0
      %s208 = scalar_select %p207, %s21, 0
      %s209 = scalar_lea.vmem %s2, %s208
      %p210 = pneg %p108
      %p211 = pneg %p105
      %p212 = pneg %p138
      %p213 = pneg %p135
      %s214 = smul.u32 2, %s20
      %p215 = scmp.lt.s32.totalorder %s19, 1
      %s216 = scalar_select %p215, %s19, 1
      %p217 = scmp.lt.s32.totalorder %s214, 1
      %s218 = scalar_select %p217, %s214, 1
      %p219 = scmp.lt.s32.totalorder %s21, 0
      %s220 = scalar_select %p219, %s21, 0
      %s221 = sadd.s32 %s220, %s218
      %s222 = smul.addr %s216, 2
      %s223 = sadd.s32 %s221, %s222
      %s224 = smul.addr %s223, 8
      %s225 = scalar_lea.vmem %s3, %s224
      %s226 = smul.u32 2, %s20
      %p227 = scmp.lt.s32.totalorder %s19, 1
      %s228 = scalar_select %p227, %s19, 1
      %p229 = scmp.lt.s32.totalorder %s226, 1
      %s230 = scalar_select %p229, %s226, 1
      %s231 = smul.addr %s228, 2
      %s232 = sadd.s32 %s230, %s231
      %s233 = smul.addr %s232, 4
      %s234 = scalar_lea.vmem %s0, %s233
      %s235 = smul.u32 2, %s20
      %p236 = scmp.lt.s32.totalorder %s21, 0
      %s237 = scalar_select %p236, %s21, 0
      %s238 = smul.addr %s237, 4
      %s239 = scalar_lea.vmem %s1, %s238
      %p240 = scmp.lt.s32.totalorder %s21, 0
      %s241 = scalar_select %p240, %s21, 0
      %s242 = scalar_lea.vmem %s2, %s241
      %s243 = smul.u32 2, %s20
      %p244 = scmp.lt.s32.totalorder %s19, 1
      %s245 = scalar_select %p244, %s19, 1
      %p246 = scmp.lt.s32.totalorder %s243, 1
      %s247 = scalar_select %p246, %s243, 1
      %p248 = scmp.lt.s32.totalorder %s21, 0
      %s249 = scalar_select %p248, %s21, 0
      %s250 = sadd.s32 %s249, %s247
      %s251 = smul.addr %s245, 2
      %s252 = sadd.s32 %s250, %s251
      %s253 = smul.addr %s252, 8
      %s254 = scalar_lea.vmem %s3, %s253
      %s255 = smul.u32 2, %s20
      %v257 = vld [vmem:[%s234] sm:$0xf]
      %v258 = vld [vmem:[%s234 + $0x4] sm:$0xf]
      %v259 = vld [vmem:[%s239] sm:$0xf]
      %v260 = vld [vmem:[%s239 + $0x4] sm:$0xf]
      %v261 = vld [vmem:[%s242] sm:$0x1]
      %v263 = vlaneseq
      %v264 = vshrl.u32 %v263, 7
      %v265 = vsub.s32 0, %v264
      %v266 = vrot.slane %v261, %v265
      %v270 = vunpack.c.l.b16 %v257
      %v271 = vunpack.c.l.b16 %v258
      %v272 = vpack.c.b16 %v271, %v270
      %v275 = vunpack.c.l.b16 %v259
      %v276 = vunpack.c.l.b16 %v260
      %v277 = vpack.c.b16 %v276, %v275
      %vm279 = vcmask 130048
      %v281 = vsel %vm279, %v272, 0
      %283 = vmatprep.subr.bf16.mxu0 0
      %284 = vmatpush1.bf16.msra.mxu0 %v277
      %285 = vmatprep.subr.bf16.mxu0 0
      %286 = vmatpush1.bf16.msra.mxu0 0
      %287 = vmatprep.subr.bf16.mxu0 0
      %288 = vmatpush1.bf16.msra.mxu0 0
      %289 = vmatprep.subr.bf16.mxu0 0
      %290 = vmatpush1.bf16.msra.mxu0 0
      %291 = vmatprep.subr.bf16.mxu0 0
      %292 = vmatpush1.bf16.msra.mxu0 0
      %293 = vmatprep.subr.bf16.mxu0 0
      %294 = vmatpush1.bf16.msra.mxu0 0
      %295 = vmatprep.subr.bf16.mxu0 0
      %296 = vmatpush1.bf16.msra.mxu0 0
      %297 = vmatprep.subr.bf16.mxu0 0
      %298 = vmatpush1.bf16.msra.mxu0 0
      %299 = vmatprep.subr.bf16.mxu0 0
      %300 = vmatpush1.bf16.msra.mxu0 0
      %301 = vmatprep.subr.bf16.mxu0 0
      %302 = vmatpush1.bf16.msra.mxu0 0
      %303 = vmatprep.subr.bf16.mxu0 0
      %304 = vmatpush1.bf16.msra.mxu0 0
      %305 = vmatprep.subr.bf16.mxu0 0
      %306 = vmatpush1.bf16.msra.mxu0 0
      %307 = vmatprep.subr.bf16.mxu0 0
      %308 = vmatpush1.bf16.msra.mxu0 0
      %309 = vmatprep.subr.bf16.mxu0 0
      %310 = vmatpush1.bf16.msra.mxu0 0
      %311 = vmatprep.subr.bf16.mxu0 0
      %312 = vmatpush1.bf16.msra.mxu0 0
      %313 = vmatprep.subr.bf16.mxu0 0
      %314 = vmatpush1.bf16.msra.mxu0 0
      %315 = vmatprep.mubr.bf16.mxu0 0
      %316 = vmatmul.mubr.bf16.gmra.mrb[0].mxu0 %v281
      %v317 = vpop.f32.mrb[0].mxu0
      %v318 = vadd.f32 %v266, %v317
      %v319 = vpop.f32.mrb[0].mxu0
      %v320 = vpop.f32.mrb[0].mxu0
      %v321 = vadd.f32 %v266, %v320
      %v322 = vpop.f32.mrb[0].mxu0
      %323 = vdwg.mxu0
      %324 = vst [vmem:[%s254] sm:$0xff] %v318
      %325 = vst [vmem:[%s254 + $0x8] sm:$0xff] %v321
      %s326 = smul.u32 2, %s20
      %p327 = scmp.lt.s32.totalorder %s19, 1
      %s328 = scalar_select %p327, %s19, 1
      %p329 = scmp.lt.s32.totalorder %s326, 1
      %s330 = scalar_select %p329, %s326, 1
      %p331 = scmp.lt.s32.totalorder %s21, 0
      %s332 = scalar_select %p331, %s21, 0
      %s333 = sadd.s32 %s332, %s330
      %s334 = smul.addr %s328, 2
      %s335 = sadd.s32 %s333, %s334
      %s336 = smul.addr %s335, 8
      %s337 = scalar_lea.vmem %s3, %s336
      // Predicated region
      $region33: #{linear_module_forward.1} parent=31 // pred_check
        %p338 = pneg %p135
      $region34: #{linear_module_forward.1} parent=31 // pred_check_branch
        %340 = sbr.rel (%p338) target = $region36
      $region35: #{linear_module_forward.1} parent=31 // pred_region
        %s341 = smul.u32 2, %s20
      $region36: #{linear_module_forward.1} parent=31 // pred_fallthru
        _
    $region32: #{linear_module_forward.1} parent=5 // pred_fallthru
      _
    %p342 = scmp.le.s32.totalorder 2, %s9
    // Predicated region
    $region37: #{linear_module_forward.1} parent=5 // pred_check
      %p343 = pneg %p342
    $region38: #{linear_module_forward.1} parent=5 // pred_check_branch
      %345 = sbr.rel (%p343) target = $region40
    $region39: #{linear_module_forward.1} parent=5 // pred_region
      %s346 = ssub.s32 %s9, 2
      // Predicated region
      $region41: #{linear_module_forward.1} parent=39 // pred_check
        %p347 = pneg %p141
      $region42: #{linear_module_forward.1} parent=39 // pred_check_branch
        %349 = sbr.rel (%p347) target = $region44
      $region43: #{linear_module_forward.1} parent=39 // pred_region
        %s350 = smul.u32 2, %s23
        %p351 = scmp.lt.s32.totalorder %s22, 1
        %s352 = scalar_select %p351, %s22, 1
        %p353 = scmp.lt.s32.totalorder %s350, 1
        %s354 = scalar_select %p353, %s350, 1
        %p355 = scmp.lt.s32.totalorder %s24, 0
        %s356 = scalar_select %p355, %s24, 0
        %s357 = sadd.s32 %s356, %s354
        %s358 = smul.addr %s352, 2
        %s359 = sadd.s32 %s357, %s358
        %s360 = smul.addr %s359, 8
        %s361 = scalar_lea.vmem %s3, %s360
      $region44: #{linear_module_forward.1} parent=39 // pred_fallthru
        _
    $region40: #{linear_module_forward.1} parent=5 // pred_fallthru
      _
  $region6: #{linear_module_forward.1} parent=0 // loop_footer
    %s13 = sadd.s32 1, %s9
  $region7: #{linear_module_forward.1} parent=0 // loop_footer_branch
    %8 = sbr.rel target = $region3
  $region8: #{linear_module_forward.1} parent=0 // loop_exit
    _

</llo_original>
